<compile_context>
chip_gen: v6e
topology: v6e:2x2x1
jax: 0.10.0
libtpu: 0.0.40
codegen_flags: <defaults>
</compile_context>

<pallas_src>
import jax
import jax.numpy as jnp
from jax.experimental import pallas as pl
from jax.experimental.pallas import tpu as pltpu

LEAKY_SLOPE = 0.2
BN_EPS = 0.001
SUBLANE = 8
MAX_TB = 2048  # rows per batch tile (multiple of 8); ~0.3 MB/tile at these widths


def _round_up(n, m):
    return ((n + m - 1) // m) * m


def _leaky_relu(v):
    return jnp.where(v > 0, v, LEAKY_SLOPE * v)


def encoder_kernel(x_ref, c_ref,
                   w1x_ref, w1c_ref, b1_ref,
                   w2h_ref, w2c_ref, b2_ref,
                   wh_ref, bh_ref,
                   out_ref):
    # BatchNorm (eval mode) is pre-folded into w*/b* by fold_params().
    c = c_ref[...]

    # _h = dropout(act(bn(FC_input([x_norm, c]))))   -- dropout == identity
    h1 = (jnp.dot(x_ref[...], w1x_ref[...], preferred_element_type=jnp.float32)
          + jnp.dot(c, w1c_ref[...], preferred_element_type=jnp.float32)
          + b1_ref[...])
    h1 = _leaky_relu(h1).astype(w2h_ref.dtype)

    # h = dropout(act(bn(FC_hidden([_h, c]))))       -- split matmul, no concat
    h2 = (jnp.dot(h1, w2h_ref[...], preferred_element_type=jnp.float32)
          + jnp.dot(c, w2c_ref[...], preferred_element_type=jnp.float32)
          + b2_ref[...])
    h2 = _leaky_relu(h2).astype(wh_ref.dtype)

    # Fused mean / log_var heads: single (TB, 2L) output.
    out_ref[...] = (jnp.dot(h2, wh_ref[...], preferred_element_type=jnp.float32)
                    + bh_ref[...]).astype(out_ref.dtype)


def fold_params(p, compute_dtype=jnp.bfloat16):
    """One-time, param-only preprocessing: fold BN, fuse heads, cast to bf16."""
    in_scale = p["bn_in_gamma"] / jnp.sqrt(p["bn_in_var"] + BN_EPS)
    in_shift = p["bn_in_beta"] - p["bn_in_mean"] * in_scale
    h_scale = p["bn_h_gamma"] / jnp.sqrt(p["bn_h_var"] + BN_EPS)
    h_shift = p["bn_h_beta"] - p["bn_h_mean"] * h_scale

    # layer 1: (x*in_scale+in_shift) @ W1x + c @ W1c + b1, then *h_scale+h_shift
    w1x_f = (in_scale[:, None] * p["w1x"]) * h_scale[None, :]
    w1c_f = p["w1c"] * h_scale[None, :]
    b1_f = (in_shift @ p["w1x"] + p["b1"]) * h_scale + h_shift

    # layer 2: h1 @ W2h + c @ W2c + b2, then *h_scale+h_shift
    w2h_f = p["w2h"] * h_scale[None, :]
    w2c_f = p["w2c"] * h_scale[None, :]
    b2_f = p["b2"] * h_scale + h_shift

    # fused mean / log_var head at natural width (2L lanes)
    w_head = jnp.concatenate([p["wm"], p["wv"]], axis=1)   # (H, 2L)
    b_head = jnp.concatenate([p["bm"], p["bv"]])            # (2L,)

    return {
        "w1x": w1x_f.astype(compute_dtype), "w1c": w1c_f.astype(compute_dtype),
        "b1": b1_f.astype(jnp.float32)[None, :],
        "w2h": w2h_f.astype(compute_dtype), "w2c": w2c_f.astype(compute_dtype),
        "b2": b2_f.astype(jnp.float32)[None, :],
        "wh": w_head.astype(compute_dtype),
        "bh": b_head.astype(jnp.float32)[None, :],
    }


def encoder_forward(x, c, fp):
    """fp = fold_params(params); returns (mean, log_var)."""
    B, Din = x.shape
    _, Dc = c.shape
    H = fp["w1x"].shape[1]
    L2 = fp["wh"].shape[1]          # 2 * latent_dim
    L = L2 // 2
    dtype = fp["w1x"].dtype

    x = x.astype(dtype)
    c = c.astype(dtype)

    # Batch tiling: big tiles to amortize per-step overhead, but aim for
    # nb >= 2 once B is large enough so both v7x TensorCores get work.
    TB = min(MAX_TB, _round_up(max(pl.cdiv(B, 2), SUBLANE), SUBLANE))
    nb = pl.cdiv(B, TB)             # ragged last block handled by Pallas

    def batch_spec(cols):
        return pl.BlockSpec((TB, cols), lambda i: (i, 0))

    def full_spec(shape):
        return pl.BlockSpec(shape, lambda i: (0,) * len(shape))

    out = pl.pallas_call(
        encoder_kernel,
        grid=(nb,),
        in_specs=[
            batch_spec(Din), batch_spec(Dc),
            full_spec(fp["w1x"].shape), full_spec(fp["w1c"].shape), full_spec(fp["b1"].shape),
            full_spec(fp["w2h"].shape), full_spec(fp["w2c"].shape), full_spec(fp["b2"].shape),
            full_spec(fp["wh"].shape), full_spec(fp["bh"].shape),
        ],
        out_specs=pl.BlockSpec((TB, L2), lambda i: (i, 0)),
        out_shape=jax.ShapeDtypeStruct((B, L2), jnp.float32),
        compiler_params=pltpu.CompilerParams(
            dimension_semantics=("parallel",),
            vmem_limit_bytes=32 * 1024 * 1024,
        ),
    )(x, c,
      fp["w1x"], fp["w1c"], fp["b1"],
      fp["w2h"], fp["w2c"], fp["b2"],
      fp["wh"], fp["bh"])

    return out[:, :L], out[:, L:]


def init_params(key, input_dim, condition_dim, hidden_dim, latent_dim):
    ks = jax.random.split(key, 12)

    def linear(kw, kb, fan_in, fan_out):
        bound = 1.0 / jnp.sqrt(fan_in)
        w = jax.random.uniform(kw, (fan_in, fan_out), jnp.float32, -bound, bound)
        b = jax.random.uniform(kb, (fan_out,), jnp.float32, -bound, bound)
        return w, b

    # FC_input : (input_dim + condition_dim) -> hidden_dim, stored split.
    w1, b1 = linear(ks[0], ks[1], input_dim + condition_dim, hidden_dim)
    # FC_hidden: (hidden_dim + condition_dim) -> hidden_dim, stored split.
    w2, b2 = linear(ks[2], ks[3], hidden_dim + condition_dim, hidden_dim)
    wm, bm = linear(ks[4], ks[5], hidden_dim, latent_dim)
    wv, bv = linear(ks[6], ks[7], hidden_dim, latent_dim)

    return {
        "w1x": w1[:input_dim], "w1c": w1[input_dim:], "b1": b1,
        "w2h": w2[:hidden_dim], "w2c": w2[hidden_dim:], "b2": b2,
        "wm": wm, "bm": bm,
        "wv": wv, "bv": bv,
        # BatchNorm1d(input_dim) — deterministic non-trivial eval-mode stats
        "bn_in_gamma": 1.0 + 0.05 * jax.random.normal(ks[8], (input_dim,), jnp.float32),
        "bn_in_beta": 0.02 * jax.random.normal(ks[9], (input_dim,), jnp.float32),
        "bn_in_mean": 0.1 * jax.random.normal(ks[10], (input_dim,), jnp.float32),
        "bn_in_var": jnp.abs(1.0 + 0.1 * jax.random.normal(ks[11], (input_dim,), jnp.float32)),
        # BatchNorm1d(hidden_dim) — the single BN module reused after both FCs
        "bn_h_gamma": jnp.ones((hidden_dim,), jnp.float32),
        "bn_h_beta": jnp.zeros((hidden_dim,), jnp.float32),
        "bn_h_mean": jnp.zeros((hidden_dim,), jnp.float32),
        "bn_h_var": jnp.ones((hidden_dim,), jnp.float32),
    }


def encoder_reference(x, c, p):
    """Pure-JAX f32 reference of the eval-mode PyTorch forward (unfolded BN)."""
    in_scale = p["bn_in_gamma"] / jnp.sqrt(p["bn_in_var"] + BN_EPS)
    in_shift = p["bn_in_beta"] - p["bn_in_mean"] * in_scale
    h_scale = p["bn_h_gamma"] / jnp.sqrt(p["bn_h_var"] + BN_EPS)
    h_shift = p["bn_h_beta"] - p["bn_h_mean"] * h_scale

    x_norm = x * in_scale + in_shift
    h1 = (x_norm @ p["w1x"] + c @ p["w1c"] + p["b1"]) * h_scale + h_shift
    h1 = jnp.where(h1 > 0, h1, LEAKY_SLOPE * h1)
    h2 = (h1 @ p["w2h"] + c @ p["w2c"] + p["b2"]) * h_scale + h_shift
    h2 = jnp.where(h2 > 0, h2, LEAKY_SLOPE * h2)
    return h2 @ p["wm"] + p["bm"], h2 @ p["wv"] + p["bv"]


if __name__ == "__main__":
    # Small shapes consistent with the module: x (B, input_dim), c (B, condition_dim)
    B, INPUT_DIM, COND_DIM, HIDDEN_DIM, LATENT_DIM = 8, 16, 8, 32, 8

    key = jax.random.PRNGKey(0)
    kx, kc, kp = jax.random.split(key, 3)
    x = jax.random.normal(kx, (B, INPUT_DIM), jnp.float32)
    c = jax.random.normal(kc, (B, COND_DIM), jnp.float32)
    params = init_params(kp, INPUT_DIM, COND_DIM, HIDDEN_DIM, LATENT_DIM)

    folded = fold_params(params)                 # one-time, param-only work
    mean, log_var = encoder_forward(x, c, folded)
    jax.block_until_ready((mean, log_var))

    ref_mean, ref_logvar = encoder_reference(x, c, params)
    # bf16-streamed operands: compare against the f32 reference with a looser tol.
    assert jnp.allclose(mean, ref_mean, atol=5e-2, rtol=5e-2), "mean mismatch"
    assert jnp.allclose(log_var, ref_logvar, atol=5e-2, rtol=5e-2), "log_var mismatch"

    print("KERNEL_OK")
</pallas_src>

<mosaic_0001>
module attributes {stable_mosaic.version = 11 : i64} {
  func.func @encoder_kernel(%arg0: i32, %arg1: memref<8x16xbf16, #tpu.memory_space<vmem>>, %arg2: memref<8x8xbf16, #tpu.memory_space<vmem>>, %arg3: memref<16x32xbf16, #tpu.memory_space<vmem>>, %arg4: memref<8x32xbf16, #tpu.memory_space<vmem>>, %arg5: memref<1x32xf32, #tpu.memory_space<vmem>>, %arg6: memref<32x32xbf16, #tpu.memory_space<vmem>>, %arg7: memref<8x32xbf16, #tpu.memory_space<vmem>>, %arg8: memref<1x32xf32, #tpu.memory_space<vmem>>, %arg9: memref<32x16xbf16, #tpu.memory_space<vmem>>, %arg10: memref<1x16xf32, #tpu.memory_space<vmem>>, %arg11: memref<8x16xf32, #tpu.memory_space<vmem>>) attributes {dimension_semantics = [#tpu.dimension_semantics<parallel>], iteration_bounds = array<i64: 1>, scalar_prefetch = 0 : i64, scratch_operands = 0 : i64, tpu.core_type = #tpu.core_type<tc>, window_params = [{transform_indices = @transform_0, window_bounds = array<i64: 8, 16>}, {transform_indices = @transform_1, window_bounds = array<i64: 8, 8>}, {pipeline_mode = #tpu.pipeline_mode<synchronous>, transform_indices = @transform_2, window_bounds = array<i64: 16, 32>}, {pipeline_mode = #tpu.pipeline_mode<synchronous>, transform_indices = @transform_3, window_bounds = array<i64: 8, 32>}, {pipeline_mode = #tpu.pipeline_mode<synchronous>, transform_indices = @transform_4, window_bounds = array<i64: 1, 32>}, {pipeline_mode = #tpu.pipeline_mode<synchronous>, transform_indices = @transform_5, window_bounds = array<i64: 32, 32>}, {pipeline_mode = #tpu.pipeline_mode<synchronous>, transform_indices = @transform_6, window_bounds = array<i64: 8, 32>}, {pipeline_mode = #tpu.pipeline_mode<synchronous>, transform_indices = @transform_7, window_bounds = array<i64: 1, 32>}, {pipeline_mode = #tpu.pipeline_mode<synchronous>, transform_indices = @transform_8, window_bounds = array<i64: 32, 16>}, {pipeline_mode = #tpu.pipeline_mode<synchronous>, transform_indices = @transform_9, window_bounds = array<i64: 1, 16>}, {transform_indices = @transform_10, window_bounds = array<i64: 8, 16>}]} {
    %c0 = arith.constant 0 : index
    %c0_0 = arith.constant 0 : index
    %0 = vector.load %arg2[%c0, %c0_0] : memref<8x8xbf16, #tpu.memory_space<vmem>>, vector<8x8xbf16>
    %c0_1 = arith.constant 0 : index
    %c0_2 = arith.constant 0 : index
    %1 = vector.load %arg1[%c0_1, %c0_2] : memref<8x16xbf16, #tpu.memory_space<vmem>>, vector<8x16xbf16>
    %c0_3 = arith.constant 0 : index
    %c0_4 = arith.constant 0 : index
    %2 = vector.load %arg3[%c0_3, %c0_4] : memref<16x32xbf16, #tpu.memory_space<vmem>>, vector<16x32xbf16>
    %cst = arith.constant dense<0.000000e+00> : vector<8x32xf32>
    %3 = tpu.matmul %1, %2, %cst {dimension_numbers = #tpu.dot_dimension_numbers<[1], [0], [0], [1], [0, 0, 1, 1], [], []>} : vector<8x16xbf16>, vector<16x32xbf16>, vector<8x32xf32> -> vector<8x32xf32>
    %c0_5 = arith.constant 0 : index
    %c0_6 = arith.constant 0 : index
    %4 = vector.load %arg4[%c0_5, %c0_6] : memref<8x32xbf16, #tpu.memory_space<vmem>>, vector<8x32xbf16>
    %cst_7 = arith.constant dense<0.000000e+00> : vector<8x32xf32>
    %5 = tpu.matmul %0, %4, %cst_7 {dimension_numbers = #tpu.dot_dimension_numbers<[1], [0], [0], [1], [0, 0, 1, 1], [], []>} : vector<8x8xbf16>, vector<8x32xbf16>, vector<8x32xf32> -> vector<8x32xf32>
    %6 = arith.addf %3, %5 : vector<8x32xf32>
    %c0_8 = arith.constant 0 : index
    %c0_9 = arith.constant 0 : index
    %7 = vector.load %arg5[%c0_8, %c0_9] : memref<1x32xf32, #tpu.memory_space<vmem>>, vector<1x32xf32>
    %8 = vector.broadcast %7 : vector<1x32xf32> to vector<8x32xf32>
    %9 = arith.addf %6, %8 : vector<8x32xf32>
    %cst_10 = arith.constant 0.000000e+00 : f32
    %10 = vector.broadcast %cst_10 : f32 to vector<8x32xf32>
    %11 = arith.cmpf ogt, %9, %10 : vector<8x32xf32>
    %cst_11 = arith.constant 2.000000e-01 : f32
    %12 = vector.broadcast %cst_11 : f32 to vector<8x32xf32>
    %13 = arith.mulf %12, %9 : vector<8x32xf32>
    %14 = arith.select %11, %9, %13 : vector<8x32xi1>, vector<8x32xf32>
    %15 = arith.truncf %14 : vector<8x32xf32> to vector<8x32xbf16>
    %c0_12 = arith.constant 0 : index
    %c0_13 = arith.constant 0 : index
    %16 = vector.load %arg6[%c0_12, %c0_13] : memref<32x32xbf16, #tpu.memory_space<vmem>>, vector<32x32xbf16>
    %cst_14 = arith.constant dense<0.000000e+00> : vector<8x32xf32>
    %17 = tpu.matmul %15, %16, %cst_14 {dimension_numbers = #tpu.dot_dimension_numbers<[1], [0], [0], [1], [0, 0, 1, 1], [], []>} : vector<8x32xbf16>, vector<32x32xbf16>, vector<8x32xf32> -> vector<8x32xf32>
    %c0_15 = arith.constant 0 : index
    %c0_16 = arith.constant 0 : index
    %18 = vector.load %arg7[%c0_15, %c0_16] : memref<8x32xbf16, #tpu.memory_space<vmem>>, vector<8x32xbf16>
    %cst_17 = arith.constant dense<0.000000e+00> : vector<8x32xf32>
    %19 = tpu.matmul %0, %18, %cst_17 {dimension_numbers = #tpu.dot_dimension_numbers<[1], [0], [0], [1], [0, 0, 1, 1], [], []>} : vector<8x8xbf16>, vector<8x32xbf16>, vector<8x32xf32> -> vector<8x32xf32>
    %20 = arith.addf %17, %19 : vector<8x32xf32>
    %c0_18 = arith.constant 0 : index
    %c0_19 = arith.constant 0 : index
    %21 = vector.load %arg8[%c0_18, %c0_19] : memref<1x32xf32, #tpu.memory_space<vmem>>, vector<1x32xf32>
    %22 = vector.broadcast %21 : vector<1x32xf32> to vector<8x32xf32>
    %23 = arith.addf %20, %22 : vector<8x32xf32>
    %cst_20 = arith.constant 0.000000e+00 : f32
    %24 = vector.broadcast %cst_20 : f32 to vector<8x32xf32>
    %25 = arith.cmpf ogt, %23, %24 : vector<8x32xf32>
    %cst_21 = arith.constant 2.000000e-01 : f32
    %26 = vector.broadcast %cst_21 : f32 to vector<8x32xf32>
    %27 = arith.mulf %26, %23 : vector<8x32xf32>
    %28 = arith.select %25, %23, %27 : vector<8x32xi1>, vector<8x32xf32>
    %29 = arith.truncf %28 : vector<8x32xf32> to vector<8x32xbf16>
    %c0_22 = arith.constant 0 : index
    %c0_23 = arith.constant 0 : index
    %30 = vector.load %arg9[%c0_22, %c0_23] : memref<32x16xbf16, #tpu.memory_space<vmem>>, vector<32x16xbf16>
    %cst_24 = arith.constant dense<0.000000e+00> : vector<8x16xf32>
    %31 = tpu.matmul %29, %30, %cst_24 {dimension_numbers = #tpu.dot_dimension_numbers<[1], [0], [0], [1], [0, 0, 1, 1], [], []>} : vector<8x32xbf16>, vector<32x16xbf16>, vector<8x16xf32> -> vector<8x16xf32>
    %c0_25 = arith.constant 0 : index
    %c0_26 = arith.constant 0 : index
    %32 = vector.load %arg10[%c0_25, %c0_26] : memref<1x16xf32, #tpu.memory_space<vmem>>, vector<1x16xf32>
    %33 = vector.broadcast %32 : vector<1x16xf32> to vector<8x16xf32>
    %34 = arith.addf %31, %33 : vector<8x16xf32>
    %c0_27 = arith.constant 0 : index
    %c0_28 = arith.constant 0 : index
    %35 = vector.load %arg11[%c0_27, %c0_28] : memref<8x16xf32, #tpu.memory_space<vmem>>, vector<8x16xf32>
    tpu.vector_store %arg11[%c0_27, %c0_28], %34 {strides = array<i32>} : memref<8x16xf32, #tpu.memory_space<vmem>>, vector<8x16xf32>,
    return
  }
  func.func @transform_0(%arg0: i32) -> (i32, i32) {
    %c0_i32 = arith.constant 0 : i32
    %c0_i32_0 = arith.constant 0 : i32
    return %arg0, %c0_i32 : i32, i32
  }
  func.func @transform_1(%arg0: i32) -> (i32, i32) {
    %c0_i32 = arith.constant 0 : i32
    %c0_i32_0 = arith.constant 0 : i32
    return %arg0, %c0_i32 : i32, i32
  }
  func.func @transform_2(%arg0: i32) -> (i32, i32) {
    %c0_i32 = arith.constant 0 : i32
    %c0_i32_0 = arith.constant 0 : i32
    %c0_i32_1 = arith.constant 0 : i32
    return %c0_i32, %c0_i32_0 : i32, i32
  }
  func.func @transform_3(%arg0: i32) -> (i32, i32) {
    %c0_i32 = arith.constant 0 : i32
    %c0_i32_0 = arith.constant 0 : i32
    %c0_i32_1 = arith.constant 0 : i32
    return %c0_i32, %c0_i32_0 : i32, i32
  }
  func.func @transform_4(%arg0: i32) -> (i32, i32) {
    %c0_i32 = arith.constant 0 : i32
    %c0_i32_0 = arith.constant 0 : i32
    %c0_i32_1 = arith.constant 0 : i32
    return %c0_i32, %c0_i32_0 : i32, i32
  }
  func.func @transform_5(%arg0: i32) -> (i32, i32) {
    %c0_i32 = arith.constant 0 : i32
    %c0_i32_0 = arith.constant 0 : i32
    %c0_i32_1 = arith.constant 0 : i32
    return %c0_i32, %c0_i32_0 : i32, i32
  }
  func.func @transform_6(%arg0: i32) -> (i32, i32) {
    %c0_i32 = arith.constant 0 : i32
    %c0_i32_0 = arith.constant 0 : i32
    %c0_i32_1 = arith.constant 0 : i32
    return %c0_i32, %c0_i32_0 : i32, i32
  }
  func.func @transform_7(%arg0: i32) -> (i32, i32) {
    %c0_i32 = arith.constant 0 : i32
    %c0_i32_0 = arith.constant 0 : i32
    %c0_i32_1 = arith.constant 0 : i32
    return %c0_i32, %c0_i32_0 : i32, i32
  }
  func.func @transform_8(%arg0: i32) -> (i32, i32) {
    %c0_i32 = arith.constant 0 : i32
    %c0_i32_0 = arith.constant 0 : i32
    %c0_i32_1 = arith.constant 0 : i32
    return %c0_i32, %c0_i32_0 : i32, i32
  }
  func.func @transform_9(%arg0: i32) -> (i32, i32) {
    %c0_i32 = arith.constant 0 : i32
    %c0_i32_0 = arith.constant 0 : i32
    %c0_i32_1 = arith.constant 0 : i32
    return %c0_i32, %c0_i32_0 : i32, i32
  }
  func.func @transform_10(%arg0: i32) -> (i32, i32) {
    %c0_i32 = arith.constant 0 : i32
    %c0_i32_0 = arith.constant 0 : i32
    return %arg0, %c0_i32 : i32, i32
  }
}

</mosaic_0001>

<llo_original>
// kernel: tpu_custom_call.1
$region0: #{tpu_custom_call.1}
  #allocation0 [shape = 'u32[]', space=smem, size = 0x4, offset = 0x4, fixed_abs, tag = 'smem constant byte address 0x4 - core index']
  #allocation1 [shape = 'u32[144,128]{1,0:T(1,128)}', space=vmem, size = 0x12000, scoped, tag = 'internal scratch']
  %s0 = inlined_call_operand.vmem [shape: bf16[8,16], index: 0, kind: input, shape index: {}]
  %s1 = inlined_call_operand.hbm [shape: bf16[8,8], index: 1, kind: input, shape index: {}]
  %s2 = inlined_call_operand.vmem [shape: bf16[16,32], index: 2, kind: input, shape index: {}]
  %s3 = inlined_call_operand.hbm [shape: bf16[8,32], index: 3, kind: input, shape index: {}]
  %s4 = inlined_call_operand.vmem [shape: f32[1,32], index: 4, kind: input, shape index: {}]
  %s5 = inlined_call_operand.vmem [shape: bf16[32,32], index: 5, kind: input, shape index: {}]
  %s6 = inlined_call_operand.hbm [shape: bf16[8,32], index: 6, kind: input, shape index: {}]
  %s7 = inlined_call_operand.vmem [shape: f32[1,32], index: 7, kind: input, shape index: {}]
  %s8 = inlined_call_operand.vmem [shape: bf16[32,16], index: 8, kind: input, shape index: {}]
  %s9 = inlined_call_operand.vmem [shape: f32[1,16], index: 9, kind: input, shape index: {}]
  %s10 = inlined_call_operand.hbm [shape: f32[8,16], index: 10, kind: output, shape index: {}]
  %s11 = sld [smem:[#allocation0]]
  $region62: #{tpu_custom_call.1} parent=0
    _
  %s13 = ssub.s32 1, %s11
  %s14 = scalar_select 0, %s13, %s11
  $region1: #{tpu_custom_call.1} parent=0
    #allocation2 [shape = 'u8[2048]{0}', space=vmem, size = 0x800, scoped, tag = 'input window, operand 1, single buffered']
    #allocation3 [shape = 's32[1]{0}', space=sflag, size = 0x4, scoped, tag = 'scoped memory for tpu_custom_call.1']
    #allocation4 [shape = 's32[1]{0}', space=sflag, size = 0x4, scoped, tag = 'scoped memory for tpu_custom_call.1']
    #allocation5 [shape = 'u8[2048]{0}', space=vmem, size = 0x800, scoped, tag = 'input window, operand 3, single buffered']
    #allocation6 [shape = 's32[1]{0}', space=sflag, size = 0x4, scoped, tag = 'scoped memory for tpu_custom_call.1']
    #allocation7 [shape = 'u8[2048]{0}', space=vmem, size = 0x800, scoped, tag = 'input window, operand 6, single buffered']
    #allocation8 [shape = 'u8[4096]{0}', space=vmem, size = 0x1000, scoped, tag = 'output window, operand 0, single buffered']
    %15 = vsyncpa [#allocation3], 0
    %16 = vsyncpa [#allocation6], 0
    %17 = vsyncpa [#allocation4], 0
    // Predicated region
    $region2: #{tpu_custom_call.1} parent=1 // pred_check
      _
    $region3: #{tpu_custom_call.1} parent=1 // pred_check_branch
      %19 = sbr.rel (0) target = $region5
    $region4: #{tpu_custom_call.1} parent=1 // pred_region
      _
    $region5: #{tpu_custom_call.1} parent=1 // pred_fallthru
      _
    // Predicated region
    $region6: #{tpu_custom_call.1} parent=1 // pred_check
      _
    $region7: #{tpu_custom_call.1} parent=1 // pred_check_branch
      %21 = sbr.rel (0) target = $region9
    $region8: #{tpu_custom_call.1} parent=1 // pred_region
      %s23 = ssub.s32 64, 64
      %24 = vsyncadd [#allocation3], %s23
      %s26 = sshll.u32 [#allocation2], 4
      %s27 = int_to_ptr.vmem [resolvable:$true] %s26
      %29 = dma.hbm_to_vmem [thread:$0]  %s1, 64, %s27, [#allocation3]
    $region9: #{tpu_custom_call.1} parent=1 // pred_fallthru
      _
    // Predicated region
    $region10: #{tpu_custom_call.1} parent=1 // pred_check
      _
    $region11: #{tpu_custom_call.1} parent=1 // pred_check_branch
      %31 = sbr.rel (0) target = $region13
    $region12: #{tpu_custom_call.1} parent=1 // pred_region
      _
    $region13: #{tpu_custom_call.1} parent=1 // pred_fallthru
      _
    // Predicated region
    $region14: #{tpu_custom_call.1} parent=1 // pred_check
      _
    $region15: #{tpu_custom_call.1} parent=1 // pred_check_branch
      %33 = sbr.rel (0) target = $region17
    $region16: #{tpu_custom_call.1} parent=1 // pred_region
      %s35 = ssub.s32 64, 64
      %36 = vsyncadd [#allocation6], %s35
      %s38 = sshll.u32 [#allocation5], 4
      %s39 = int_to_ptr.vmem [resolvable:$true] %s38
      %41 = dma.hbm_to_vmem [thread:$0]  %s3, 64, %s39, [#allocation6]
    $region17: #{tpu_custom_call.1} parent=1 // pred_fallthru
      _
    // Predicated region
    $region18: #{tpu_custom_call.1} parent=1 // pred_check
      _
    $region19: #{tpu_custom_call.1} parent=1 // pred_check_branch
      %43 = sbr.rel (0) target = $region21
    $region20: #{tpu_custom_call.1} parent=1 // pred_region
      _
    $region21: #{tpu_custom_call.1} parent=1 // pred_fallthru
      _
    // Predicated region
    $region22: #{tpu_custom_call.1} parent=1 // pred_check
      _
    $region23: #{tpu_custom_call.1} parent=1 // pred_check_branch
      %45 = sbr.rel (0) target = $region25
    $region24: #{tpu_custom_call.1} parent=1 // pred_region
      _
    $region25: #{tpu_custom_call.1} parent=1 // pred_fallthru
      _
    // Predicated region
    $region26: #{tpu_custom_call.1} parent=1 // pred_check
      _
    $region27: #{tpu_custom_call.1} parent=1 // pred_check_branch
      %47 = sbr.rel (0) target = $region29
    $region28: #{tpu_custom_call.1} parent=1 // pred_region
      %s49 = ssub.s32 64, 64
      %50 = vsyncadd [#allocation6], %s49
      %s52 = sshll.u32 [#allocation7], 4
      %s53 = int_to_ptr.vmem [resolvable:$true] %s52
      %55 = dma.hbm_to_vmem [thread:$0]  %s6, 64, %s53, [#allocation6]
    $region29: #{tpu_custom_call.1} parent=1 // pred_fallthru
      _
    // Predicated region
    $region30: #{tpu_custom_call.1} parent=1 // pred_check
      _
    $region31: #{tpu_custom_call.1} parent=1 // pred_check_branch
      %57 = sbr.rel (0) target = $region33
    $region32: #{tpu_custom_call.1} parent=1 // pred_region
      _
    $region33: #{tpu_custom_call.1} parent=1 // pred_fallthru
      _
    // Predicated region
    $region34: #{tpu_custom_call.1} parent=1 // pred_check
      _
    $region35: #{tpu_custom_call.1} parent=1 // pred_check_branch
      %59 = sbr.rel (0) target = $region37
    $region36: #{tpu_custom_call.1} parent=1 // pred_region
      _
    $region37: #{tpu_custom_call.1} parent=1 // pred_fallthru
      _
    // Predicated region
    $region38: #{tpu_custom_call.1} parent=1 // pred_check
      _
    $region39: #{tpu_custom_call.1} parent=1 // pred_check_branch
      %61 = sbr.rel (0) target = $region41
    $region40: #{tpu_custom_call.1} parent=1 // pred_region
      _
    $region41: #{tpu_custom_call.1} parent=1 // pred_fallthru
      _
    // Predicated region
    $region42: #{tpu_custom_call.1} parent=1 // pred_check
      _
    $region43: #{tpu_custom_call.1} parent=1 // pred_check_branch
      %63 = sbr.rel (0) target = $region45
    $region44: #{tpu_custom_call.1} parent=1 // pred_region
      %64 = dma.done [#allocation3], 64
    $region45: #{tpu_custom_call.1} parent=1 // pred_fallthru
      _
    // Predicated region
    $region46: #{tpu_custom_call.1} parent=1 // pred_check
      _
    $region47: #{tpu_custom_call.1} parent=1 // pred_check_branch
      %66 = sbr.rel (0) target = $region49
    $region48: #{tpu_custom_call.1} parent=1 // pred_region
      %67 = dma.done [#allocation6], 64
    $region49: #{tpu_custom_call.1} parent=1 // pred_fallthru
      _
    // Predicated region
    $region50: #{tpu_custom_call.1} parent=1 // pred_check
      _
    $region51: #{tpu_custom_call.1} parent=1 // pred_check_branch
      %69 = sbr.rel (0) target = $region53
    $region52: #{tpu_custom_call.1} parent=1 // pred_region
      %70 = dma.done [#allocation6], 64
    $region53: #{tpu_custom_call.1} parent=1 // pred_fallthru
      _
    %v72 = vld [vmem:[#allocation2] sm:$0xf]
    %v73 = vld [vmem:[%s0] sm:$0xf]
    %v74 = vld [vmem:[%s2] sm:$0xf]
    %v75 = vld [vmem:[%s2 + $0x4] sm:$0xf]
    %v76 = vld [vmem:[#allocation5] sm:$0xf]
    %vm77 = vcmask 64512
    %v79 = vsel %vm77, %v72, 0
    %vm81 = vcmask 1043456
    %v83 = vsel %vm81, %v76, 0
    %85 = vmatprep.subr.bf16.mxu0 0
    %86 = vmatpush1.bf16.msra.mxu0 0
    %87 = vmatprep.subr.bf16.mxu0 0
    %88 = vmatpush1.bf16.msra.mxu0 0
    %89 = vmatprep.subr.bf16.mxu0 0
    %90 = vmatpush1.bf16.msra.mxu0 0
    %91 = vmatprep.subr.bf16.mxu0 0
    %92 = vmatpush1.bf16.msra.mxu0 0
    %93 = vmatprep.subr.bf16.mxu0 0
    %94 = vmatpush1.bf16.msra.mxu0 0
    %95 = vmatprep.subr.bf16.mxu0 0
    %96 = vmatpush1.bf16.msra.mxu0 0
    %97 = vmatprep.subr.bf16.mxu0 0
    %98 = vmatpush1.bf16.msra.mxu0 0
    %99 = vmatprep.subr.bf16.mxu0 0
    %100 = vmatpush1.bf16.msra.mxu0 %v83
    %101 = vmatprep.subr.bf16.mxu0 0
    %102 = vmatpush2.bf16.msra.mxu0 0
    %103 = vmatprep.subr.bf16.mxu0 0
    %104 = vmatpush2.bf16.msra.mxu0 0
    %105 = vmatprep.subr.bf16.mxu0 0
    %106 = vmatpush2.bf16.msra.mxu0 0
    %107 = vmatprep.subr.bf16.mxu0 0
    %108 = vmatpush2.bf16.msra.mxu0 0
    %109 = vmatprep.subr.bf16.mxu0 0
    %110 = vmatpush2.bf16.msra.mxu0 0
    %111 = vmatprep.subr.bf16.mxu0 0
    %112 = vmatpush2.bf16.msra.mxu0 0
    %113 = vmatprep.subr.bf16.mxu0 0
    %114 = vmatpush2.bf16.msra.mxu0 0
    %115 = vmatprep.subr.bf16.mxu0 0
    %116 = vmatpush2.bf16.msra.mxu0 0
    %117 = vmatprep.mubr.bf16.mxu0 0
    %118 = vmatmul.mubr.bf16.gmra.mxu0 %v79
    %v119 = vpop.f32.mrf.mxu0
    %v120 = vadd.f32 0.0, %v119
    %v121 = vpop.f32.mrf.mxu0
    %v122 = vpop.f32.mrf.mxu0
    %v123 = vpop.f32.mrf.mxu0
    %124 = vdwg.mxu0
    %v127 = vunpack.c.l.b16 %v74
    %v128 = vunpack.c.l.b16 %v75
    %v129 = vpack.c.b16 %v128, %v127
    %vm131 = vcmask 130048
    %v133 = vsel %vm131, %v73, 0
    %135 = vmatprep.subr.bf16.mxu0 0
    %136 = vmatpush1.bf16.msra.mxu0 0
    %137 = vmatprep.subr.bf16.mxu0 0
    %138 = vmatpush1.bf16.msra.mxu0 0
    %139 = vmatprep.subr.bf16.mxu0 0
    %140 = vmatpush1.bf16.msra.mxu0 0
    %141 = vmatprep.subr.bf16.mxu0 0
    %142 = vmatpush1.bf16.msra.mxu0 0
    %143 = vmatprep.subr.bf16.mxu0 0
    %144 = vmatpush1.bf16.msra.mxu0 0
    %145 = vmatprep.subr.bf16.mxu0 0
    %146 = vmatpush1.bf16.msra.mxu0 0
    %147 = vmatprep.subr.bf16.mxu0 0
    %148 = vmatpush1.bf16.msra.mxu0 0
    %149 = vmatprep.subr.bf16.mxu0 0
    %150 = vmatpush1.bf16.msra.mxu0 %v129
    %151 = vmatprep.subr.bf16.mxu0 0
    %152 = vmatpush2.bf16.msra.mxu0 0
    %153 = vmatprep.subr.bf16.mxu0 0
    %154 = vmatpush2.bf16.msra.mxu0 0
    %155 = vmatprep.subr.bf16.mxu0 0
    %156 = vmatpush2.bf16.msra.mxu0 0
    %157 = vmatprep.subr.bf16.mxu0 0
    %158 = vmatpush2.bf16.msra.mxu0 0
    %159 = vmatprep.subr.bf16.mxu0 0
    %160 = vmatpush2.bf16.msra.mxu0 0
    %161 = vmatprep.subr.bf16.mxu0 0
    %162 = vmatpush2.bf16.msra.mxu0 0
    %163 = vmatprep.subr.bf16.mxu0 0
    %164 = vmatpush2.bf16.msra.mxu0 0
    %165 = vmatprep.subr.bf16.mxu0 0
    %166 = vmatpush2.bf16.msra.mxu0 0
    %167 = vmatprep.mubr.bf16.mxu0 0
    %168 = vmatmul.mubr.bf16.gmra.mxu0 %v133
    %v169 = vpop.f32.mrf.mxu0
    %v170 = vadd.f32 %v120, %v169
    %v171 = vpop.f32.mrf.mxu0
    %v172 = vpop.f32.mrf.mxu0
    %v173 = vpop.f32.mrf.mxu0
    %174 = vdwg.mxu0
    %v175 = vld [vmem:[%s4] sm:$0x1]
    %v177 = vlaneseq
    %v178 = vshrl.u32 %v177, 7
    %v179 = vsub.s32 0, %v178
    %v180 = vrot.slane %v175, %v179
    %v182 = vadd.f32 %v170, %v180
    %vm183 = vcmp.gt.f32.partialorder %v182, 0.0
    %v184 = vmul.f32 %v182, 0.2
    %v185 = vsel %vm183, %v182, %v184
    %v186 = vpack.c.bf16 %v185, %v185
    %v187 = vld [vmem:[%s5] sm:$0xf]
    %v188 = vld [vmem:[%s5 + $0x4] sm:$0xf]
    %v189 = vld [vmem:[%s5 + $0x8] sm:$0xf]
    %v190 = vld [vmem:[%s5 + $0xc] sm:$0xf]
    %v191 = vld [vmem:[#allocation7] sm:$0xf]
    %v193 = vsel %vm81, %v191, 0
    %195 = vmatprep.subr.bf16.mxu0 0
    %196 = vmatpush1.bf16.msra.mxu0 0
    %197 = vmatprep.subr.bf16.mxu0 0
    %198 = vmatpush1.bf16.msra.mxu0 0
    %199 = vmatprep.subr.bf16.mxu0 0
    %200 = vmatpush1.bf16.msra.mxu0 0
    %201 = vmatprep.subr.bf16.mxu0 0
    %202 = vmatpush1.bf16.msra.mxu0 0
    %203 = vmatprep.subr.bf16.mxu0 0
    %204 = vmatpush1.bf16.msra.mxu0 0
    %205 = vmatprep.subr.bf16.mxu0 0
    %206 = vmatpush1.bf16.msra.mxu0 0
    %207 = vmatprep.subr.bf16.mxu0 0
    %208 = vmatpush1.bf16.msra.mxu0 0
    %209 = vmatprep.subr.bf16.mxu0 0
    %210 = vmatpush1.bf16.msra.mxu0 %v193
    %211 = vmatprep.subr.bf16.mxu0 0
    %212 = vmatpush2.bf16.msra.mxu0 0
    %213 = vmatprep.subr.bf16.mxu0 0
    %214 = vmatpush2.bf16.msra.mxu0 0
    %215 = vmatprep.subr.bf16.mxu0 0
    %216 = vmatpush2.bf16.msra.mxu0 0
    %217 = vmatprep.subr.bf16.mxu0 0
    %218 = vmatpush2.bf16.msra.mxu0 0
    %219 = vmatprep.subr.bf16.mxu0 0
    %220 = vmatpush2.bf16.msra.mxu0 0
    %221 = vmatprep.subr.bf16.mxu0 0
    %222 = vmatpush2.bf16.msra.mxu0 0
    %223 = vmatprep.subr.bf16.mxu0 0
    %224 = vmatpush2.bf16.msra.mxu0 0
    %225 = vmatprep.subr.bf16.mxu0 0
    %226 = vmatpush2.bf16.msra.mxu0 0
    %227 = vmatprep.mubr.bf16.mxu0 0
    %228 = vmatmul.mubr.bf16.gmra.mxu0 %v79
    %v229 = vpop.f32.mrf.mxu0
    %v230 = vadd.f32 0.0, %v229
    %v231 = vpop.f32.mrf.mxu0
    %v232 = vpop.f32.mrf.mxu0
    %v233 = vpop.f32.mrf.mxu0
    %234 = vdwg.mxu0
    %v239 = vunpack.c.l.b16 %v187
    %v240 = vunpack.c.l.b16 %v188
    %v241 = vunpack.c.l.b16 %v189
    %v242 = vunpack.c.l.b16 %v190
    %v243 = vpack.c.b16 %v240, %v239
    %v244 = vpack.c.b16 %v242, %v241
    %vm247 = vcmask 261120
    %v249 = vsel %vm247, %v186, 0
    %251 = vmatprep.subr.bf16.mxu0 0
    %252 = vmatpush1.bf16.msra.mxu0 0
    %253 = vmatprep.subr.bf16.mxu0 0
    %254 = vmatpush1.bf16.msra.mxu0 0
    %255 = vmatprep.subr.bf16.mxu0 0
    %256 = vmatpush1.bf16.msra.mxu0 0
    %257 = vmatprep.subr.bf16.mxu0 0
    %258 = vmatpush1.bf16.msra.mxu0 0
    %259 = vmatprep.subr.bf16.mxu0 0
    %260 = vmatpush1.bf16.msra.mxu0 0
    %261 = vmatprep.subr.bf16.mxu0 0
    %262 = vmatpush1.bf16.msra.mxu0 0
    %263 = vmatprep.subr.bf16.mxu0 0
    %264 = vmatpush1.bf16.msra.mxu0 %v244
    %265 = vmatprep.subr.bf16.mxu0 0
    %266 = vmatpush1.bf16.msra.mxu0 %v243
    %267 = vmatprep.subr.bf16.mxu0 0
    %268 = vmatpush2.bf16.msra.mxu0 0
    %269 = vmatprep.subr.bf16.mxu0 0
    %270 = vmatpush2.bf16.msra.mxu0 0
    %271 = vmatprep.subr.bf16.mxu0 0
    %272 = vmatpush2.bf16.msra.mxu0 0
    %273 = vmatprep.subr.bf16.mxu0 0
    %274 = vmatpush2.bf16.msra.mxu0 0
    %275 = vmatprep.subr.bf16.mxu0 0
    %276 = vmatpush2.bf16.msra.mxu0 0
    %277 = vmatprep.subr.bf16.mxu0 0
    %278 = vmatpush2.bf16.msra.mxu0 0
    %279 = vmatprep.subr.bf16.mxu0 0
    %280 = vmatpush2.bf16.msra.mxu0 0
    %281 = vmatprep.subr.bf16.mxu0 0
    %282 = vmatpush2.bf16.msra.mxu0 0
    %283 = vmatprep.mubr.bf16.mxu0 0
    %284 = vmatmul.mubr.bf16.gmra.mxu0 %v249
    %v285 = vpop.f32.mrf.mxu0
    %v286 = vadd.f32 %v230, %v285
    %v287 = vpop.f32.mrf.mxu0
    %v288 = vpop.f32.mrf.mxu0
    %v289 = vpop.f32.mrf.mxu0
    %290 = vdwg.mxu0
    %v291 = vld [vmem:[%s7] sm:$0x1]
    %v293 = vlaneseq
    %v294 = vshrl.u32 %v293, 7
    %v295 = vsub.s32 0, %v294
    %v296 = vrot.slane %v291, %v295
    %v298 = vadd.f32 %v286, %v296
    %vm299 = vcmp.gt.f32.partialorder %v298, 0.0
    %v300 = vmul.f32 %v298, 0.2
    %v301 = vsel %vm299, %v298, %v300
    %v302 = vpack.c.bf16 %v301, %v301
    %v303 = vld [vmem:[%s8] sm:$0xf]
    %v304 = vld [vmem:[%s8 + $0x4] sm:$0xf]
    %v305 = vld [vmem:[%s8 + $0x8] sm:$0xf]
    %v306 = vld [vmem:[%s8 + $0xc] sm:$0xf]
    %v307 = vld [vmem:[%s9] sm:$0x1]
    %v309 = vlaneseq
    %v310 = vshrl.u32 %v309, 7
    %v311 = vsub.s32 0, %v310
    %v312 = vrot.slane %v307, %v311
    %v318 = vunpack.c.l.b16 %v303
    %v319 = vunpack.c.l.b16 %v304
    %v320 = vunpack.c.l.b16 %v305
    %v321 = vunpack.c.l.b16 %v306
    %v322 = vpack.c.b16 %v319, %v318
    %v323 = vpack.c.b16 %v321, %v320
    %v327 = vsel %vm247, %v302, 0
    %329 = vmatprep.subr.bf16.mxu0 0
    %330 = vmatpush1.bf16.msra.mxu0 0
    %331 = vmatprep.subr.bf16.mxu0 0
    %332 = vmatpush1.bf16.msra.mxu0 0
    %333 = vmatprep.subr.bf16.mxu0 0
    %334 = vmatpush1.bf16.msra.mxu0 0
    %335 = vmatprep.subr.bf16.mxu0 0
    %336 = vmatpush1.bf16.msra.mxu0 0
    %337 = vmatprep.subr.bf16.mxu0 0
    %338 = vmatpush1.bf16.msra.mxu0 0
    %339 = vmatprep.subr.bf16.mxu0 0
    %340 = vmatpush1.bf16.msra.mxu0 0
    %341 = vmatprep.subr.bf16.mxu0 0
    %342 = vmatpush1.bf16.msra.mxu0 %v323
    %343 = vmatprep.subr.bf16.mxu0 0
    %344 = vmatpush1.bf16.msra.mxu0 %v322
    %345 = vmatprep.subr.bf16.mxu0 0
    %346 = vmatpush2.bf16.msra.mxu0 0
    %347 = vmatprep.subr.bf16.mxu0 0
    %348 = vmatpush2.bf16.msra.mxu0 0
    %349 = vmatprep.subr.bf16.mxu0 0
    %350 = vmatpush2.bf16.msra.mxu0 0
    %351 = vmatprep.subr.bf16.mxu0 0
    %352 = vmatpush2.bf16.msra.mxu0 0
    %353 = vmatprep.subr.bf16.mxu0 0
    %354 = vmatpush2.bf16.msra.mxu0 0
    %355 = vmatprep.subr.bf16.mxu0 0
    %356 = vmatpush2.bf16.msra.mxu0 0
    %357 = vmatprep.subr.bf16.mxu0 0
    %358 = vmatpush2.bf16.msra.mxu0 0
    %359 = vmatprep.subr.bf16.mxu0 0
    %360 = vmatpush2.bf16.msra.mxu0 0
    %361 = vmatprep.mubr.bf16.mxu0 0
    %362 = vmatmul.mubr.bf16.gmra.mxu0 %v327
    %v363 = vpop.f32.mrf.mxu0
    %v364 = vadd.f32 %v312, %v363
    %v365 = vpop.f32.mrf.mxu0
    %v366 = vpop.f32.mrf.mxu0
    %v367 = vpop.f32.mrf.mxu0
    %368 = vdwg.mxu0
    %369 = vst.msk [vmem:[#allocation8] sm:$0xff] %vm131, %v364
    // Predicated region
    $region54: #{tpu_custom_call.1} parent=1 // pred_check
      _
    $region55: #{tpu_custom_call.1} parent=1 // pred_check_branch
      %371 = sbr.rel (0) target = $region57
    $region56: #{tpu_custom_call.1} parent=1 // pred_region
      %s373 = ssub.s32 128, 128
      %374 = vsyncadd [#allocation4], %s373
      %s376 = sshll.u32 [#allocation8], 4
      %s377 = int_to_ptr.vmem [resolvable:$true] %s376
      %379 = dma.vmem_to_hbm [thread:$0]  %s377, 128, %s10, [#allocation4]
    $region57: #{tpu_custom_call.1} parent=1 // pred_fallthru
      _
    // Predicated region
    $region58: #{tpu_custom_call.1} parent=1 // pred_check
      _
    $region59: #{tpu_custom_call.1} parent=1 // pred_check_branch
      %381 = sbr.rel (0) target = $region61
    $region60: #{tpu_custom_call.1} parent=1 // pred_region
      %382 = dma.done [#allocation4], 128
    $region61: #{tpu_custom_call.1} parent=1 // pred_fallthru
      _
    %383 = vsyncpa [#allocation3], 1
    %384 = vsyncpa [#allocation6], 1
    %385 = vsyncpa [#allocation4], 1

</llo_original>
